<compile_context>
chip_gen: v7x
topology: tpu7x:2x2x1
jax: 0.10.0
libtpu: 0.0.40
codegen_flags: <defaults>
</compile_context>

<pallas_src>
import jax
import jax.numpy as jnp
from jax.experimental import pallas as pl
from jax.experimental.pallas import tpu as pltpu

_LANE = 128
_SUBLANE = 16  # satisfies (8,128) f32 tiling and (16,128) bf16 packing


def _round_up(x, m):
    return (x + m - 1) // m * m


def _vmem_capacity_bytes():
    try:
        return int(pltpu.get_tpu_info().vmem_capacity_bytes)
    except Exception:
        return 64 * 1024 * 1024  # conservative: v7x per-TC physical VMEM


def _flatten_head_kernel(x_ref, w_ref, b_ref, o_ref, acc_ref):
    # x_ref: [tm, tk] (native x dtype), w_ref: [tk, tw_pad] (bf16),
    # b_ref: [1, tw_pad] (f32, resident), o_ref: [tm, tw_pad],
    # acc_ref: [tm, tw_pad] f32 scratch accumulator.
    k = pl.program_id(1)

    @pl.when(k == 0)
    def _():
        acc_ref[...] = jnp.zeros_like(acc_ref)

    # Cast to the MXU compute dtype on the VPU (hidden under DMA/MXU) instead
    # of materialising a bf16 copy of x in HBM.
    x = x_ref[...].astype(w_ref.dtype)
    acc_ref[...] += jnp.dot(x, w_ref[...], preferred_element_type=jnp.float32)

    @pl.when(k == pl.num_programs(1) - 1)
    def _():
        o_ref[...] = (acc_ref[...] + b_ref[...]).astype(o_ref.dtype)


def prepare_flatten_head_params(weight, bias, *, compute_dtype=jnp.bfloat16):
    """One-time weight prep (transpose + cast + lane-pad). Cache across calls."""
    tw, nf = weight.shape
    assert bias.shape == (tw,)
    tw_pad = _round_up(tw, _LANE)
    w_t = weight.T.astype(compute_dtype)            # [nf, tw]  (x @ W.T + b)
    b2d = bias.astype(jnp.float32).reshape(1, tw)
    if tw_pad != tw:
        w_t = jnp.pad(w_t, ((0, 0), (0, tw_pad - tw)))
        b2d = jnp.pad(b2d, ((0, 0), (0, tw_pad - tw)))
    return w_t, b2d


def _pick_row_tile(M, tm_max):
    tm = min(tm_max, _round_up(M, _SUBLANE))
    # v7x has 2 TensorCores; the "parallel" row axis needs >= 2 grid steps to
    # use both.  Splitting costs ~0.35us/step on single-TC chips: negligible.
    if pl.cdiv(M, tm) < 2 and M > 2 * _SUBLANE:
        tm = _round_up(pl.cdiv(M, 2), _SUBLANE)
    return tm


def _pick_k_tile(nf, tm, tw_pad, x_isz, o_isz, vmem_budget):
    def usage(tk):
        return (2 * tm * tk * x_isz            # double-buffered x tile
                + 2 * tk * tw_pad * 2          # double-buffered bf16 weight
                + 2 * tw_pad * 4               # bias
                + 2 * tm * tw_pad * o_isz      # double-buffered out tile
                + tm * tw_pad * 4)             # f32 accumulator scratch

    if usage(nf) <= vmem_budget:
        return nf, usage(nf)
    # Largest lane-aligned divisor of nf that fits the budget (keeps tm big
    # and the pipeline fully double-buffered for any head_nf).
    tk = (nf // _LANE) * _LANE
    while tk >= _LANE:
        if nf % tk == 0 and usage(tk) <= vmem_budget:
            return tk, usage(tk)
        tk -= _LANE
    # TODO(synk): pad nf on the weight (one-time) for shapes with no
    # lane-aligned divisor; fall back to the full reduction here.
    return nf, usage(nf)


def flatten_head_apply(x, w_t, b2d, target_window, *, tm_max=512, out_dtype=None):
    """x: [B, n_vars, d_model, patch_num]; w_t/b2d from prepare_flatten_head_params."""
    B, n_vars, d_model, patch_num = x.shape
    nf = d_model * patch_num
    nf_w, tw_pad = w_t.shape
    assert nf_w == nf
    tw = target_window
    assert tw <= tw_pad

    out_dtype = x.dtype if out_dtype is None else out_dtype
    M = B * n_vars
    x2d = x.reshape(M, nf)                       # free reshape; no cast / pad

    x_isz = jnp.dtype(x.dtype).itemsize
    o_isz = jnp.dtype(out_dtype).itemsize

    tm = _pick_row_tile(M, tm_max)
    vmem_cap = _vmem_capacity_bytes()
    tk, usage = _pick_k_tile(nf, tm, tw_pad, x_isz, o_isz, int(vmem_cap * 0.75))
    nk = pl.cdiv(nf, tk)
    grid = (pl.cdiv(M, tm), nk)

    vmem_limit = int(min(vmem_cap, max(usage + (4 << 20), 16 << 20)))

    cost = pl.CostEstimate(
        flops=2 * M * nf * tw_pad,
        transcendentals=0,
        bytes_accessed=(M * nf * x_isz            # x streamed once
                        + nf * tw_pad * 2         # bf16 weight
                        + tw_pad * 4              # bias
                        + M * tw_pad * o_isz),    # output
    )

    out2d = pl.pallas_call(
        _flatten_head_kernel,
        out_shape=jax.ShapeDtypeStruct((M, tw_pad), out_dtype),
        grid=grid,
        in_specs=[
            pl.BlockSpec((tm, tk), lambda i, k: (i, k)),      # streamed x rows
            pl.BlockSpec((tk, tw_pad), lambda i, k: (k, 0)),  # weight slab
            pl.BlockSpec((1, tw_pad), lambda i, k: (0, 0)),   # bias, resident
        ],
        out_specs=pl.BlockSpec((tm, tw_pad), lambda i, k: (i, 0)),
        scratch_shapes=[pltpu.VMEM((tm, tw_pad), jnp.float32)],
        compiler_params=pltpu.CompilerParams(
            dimension_semantics=("parallel", "arbitrary"),
            vmem_limit_bytes=vmem_limit,
        ),
        cost_estimate=cost,
    )(x2d, w_t, b2d)

    # Strip lane padding; Dropout(p=0) / eval mode is identity.
    return out2d[:, :tw].reshape(B, n_vars, tw)


def flatten_head(x, weight, bias, **kwargs):
    """Convenience one-shot wrapper (prepares weights every call)."""
    w_t, b2d = prepare_flatten_head_params(weight, bias)
    return flatten_head_apply(x, w_t, b2d, weight.shape[0], **kwargs)


if __name__ == "__main__":
    # Small shapes consistent with the module.
    B, n_vars, d_model, patch_num = 2, 4, 16, 8
    nf = d_model * patch_num          # 128
    target_window = 32

    key = jax.random.PRNGKey(0)
    kx, kw, kb = jax.random.split(key, 3)

    x = jax.random.normal(kx, (B, n_vars, d_model, patch_num), dtype=jnp.float32)

    # Deterministic init matching nn.Linear's U(-1/sqrt(nf), 1/sqrt(nf)) scheme.
    bound = 1.0 / jnp.sqrt(jnp.float32(nf))
    weight = jax.random.uniform(kw, (target_window, nf), jnp.float32, -bound, bound)
    bias = jax.random.uniform(kb, (target_window,), jnp.float32, -bound, bound)

    # One-time weight prep (cache across inference calls), then jit the apply
    # so the glue (reshape / slice) fuses around the kernel.
    w_t, b2d = prepare_flatten_head_params(weight, bias)
    apply_fn = jax.jit(flatten_head_apply, static_argnames=("target_window",))
    out = apply_fn(x, w_t, b2d, target_window=target_window)
    out = jax.block_until_ready(out)

    # Reference check (pure JAX, f32).  Tolerance accounts for the in-kernel
    # bf16 cast on the MXU path; accumulation stays f32.
    ref = x.reshape(B, n_vars, nf) @ weight.T + bias
    assert out.shape == (B, n_vars, target_window)
    assert jnp.allclose(out, ref, atol=2e-2, rtol=2e-2)

    print("KERNEL_OK")
</pallas_src>

<mosaic_0001>
module attributes {stable_mosaic.version = 11 : i64} {
  func.func @_flatten_head_kernel(%arg0: i32, %arg1: i32, %arg2: memref<16x128xf32, #tpu.memory_space<vmem>>, %arg3: memref<128x128xbf16, #tpu.memory_space<vmem>>, %arg4: memref<1x128xf32, #tpu.memory_space<vmem>>, %arg5: memref<16x128xf32, #tpu.memory_space<vmem>>, %arg6: memref<16x128xf32, #tpu.memory_space<vmem>>) attributes {dimension_semantics = [#tpu.dimension_semantics<parallel>, #tpu.dimension_semantics<arbitrary>], iteration_bounds = array<i64: 1, 1>, scalar_prefetch = 0 : i64, scratch_operands = 1 : i64, tpu.core_type = #tpu.core_type<tc>, window_params = [{transform_indices = @transform_0, window_bounds = array<i64: 16, 128>}, {transform_indices = @transform_1, window_bounds = array<i64: 128, 128>}, {pipeline_mode = #tpu.pipeline_mode<synchronous>, transform_indices = @transform_2, window_bounds = array<i64: 1, 128>}, {transform_indices = @transform_3, window_bounds = array<i64: 16, 128>}]} {
    %c0_i32 = arith.constant 0 : i32
    %0 = arith.cmpi eq, %arg1, %c0_i32 : i32
    %1 = arith.extui %0 : i1 to i32
    %c0_i32_0 = arith.constant 0 : i32
    %2 = arith.cmpi ne, %1, %c0_i32_0 : i32
    scf.if %2 {
      %cst_10 = arith.constant 0.000000e+00 : f32
      %13 = vector.broadcast %cst_10 : f32 to vector<16x128xf32>
      %c0_11 = arith.constant 0 : index
      %c0_12 = arith.constant 0 : index
      %14 = vector.load %arg6[%c0_11, %c0_12] : memref<16x128xf32, #tpu.memory_space<vmem>>, vector<16x128xf32>
      tpu.vector_store %arg6[%c0_11, %c0_12], %13 {strides = array<i32>} : memref<16x128xf32, #tpu.memory_space<vmem>>, vector<16x128xf32>,
    } else {
    }
    %c0 = arith.constant 0 : index
    %c0_1 = arith.constant 0 : index
    %3 = vector.load %arg2[%c0, %c0_1] : memref<16x128xf32, #tpu.memory_space<vmem>>, vector<16x128xf32>
    %4 = arith.truncf %3 : vector<16x128xf32> to vector<16x128xbf16>
    %c0_2 = arith.constant 0 : index
    %c0_3 = arith.constant 0 : index
    %5 = vector.load %arg6[%c0_2, %c0_3] : memref<16x128xf32, #tpu.memory_space<vmem>>, vector<16x128xf32>
    %c0_4 = arith.constant 0 : index
    %c0_5 = arith.constant 0 : index
    %6 = vector.load %arg3[%c0_4, %c0_5] : memref<128x128xbf16, #tpu.memory_space<vmem>>, vector<128x128xbf16>
    %cst = arith.constant dense<0.000000e+00> : vector<16x128xf32>
    %7 = tpu.matmul %4, %6, %cst {dimension_numbers = #tpu.dot_dimension_numbers<[1], [0], [0], [1], [0, 0, 1, 1], [], []>} : vector<16x128xbf16>, vector<128x128xbf16>, vector<16x128xf32> -> vector<16x128xf32>
    %8 = arith.addf %5, %7 : vector<16x128xf32>
    %c0_6 = arith.constant 0 : index
    %c0_7 = arith.constant 0 : index
    %9 = vector.load %arg6[%c0_6, %c0_7] : memref<16x128xf32, #tpu.memory_space<vmem>>, vector<16x128xf32>
    tpu.vector_store %arg6[%c0_6, %c0_7], %8 {strides = array<i32>} : memref<16x128xf32, #tpu.memory_space<vmem>>, vector<16x128xf32>,
    %c0_i32_8 = arith.constant 0 : i32
    %10 = arith.cmpi eq, %arg1, %c0_i32_8 : i32
    %11 = arith.extui %10 : i1 to i32
    %c0_i32_9 = arith.constant 0 : i32
    %12 = arith.cmpi ne, %11, %c0_i32_9 : i32
    scf.if %12 {
      %c0_10 = arith.constant 0 : index
      %c0_11 = arith.constant 0 : index
      %13 = vector.load %arg6[%c0_10, %c0_11] : memref<16x128xf32, #tpu.memory_space<vmem>>, vector<16x128xf32>
      %c0_12 = arith.constant 0 : index
      %c0_13 = arith.constant 0 : index
      %14 = vector.load %arg4[%c0_12, %c0_13] : memref<1x128xf32, #tpu.memory_space<vmem>>, vector<1x128xf32>
      %15 = vector.broadcast %14 : vector<1x128xf32> to vector<16x128xf32>
      %16 = arith.addf %13, %15 : vector<16x128xf32>
      %c0_14 = arith.constant 0 : index
      %c0_15 = arith.constant 0 : index
      %17 = vector.load %arg5[%c0_14, %c0_15] : memref<16x128xf32, #tpu.memory_space<vmem>>, vector<16x128xf32>
      tpu.vector_store %arg5[%c0_14, %c0_15], %16 {strides = array<i32>} : memref<16x128xf32, #tpu.memory_space<vmem>>, vector<16x128xf32>,
    } else {
    }
    return
  }
  func.func @transform_0(%arg0: i32, %arg1: i32) -> (i32, i32) {
    %c0_i32 = arith.constant 0 : i32
    return %arg0, %arg1 : i32, i32
  }
  func.func @transform_1(%arg0: i32, %arg1: i32) -> (i32, i32) {
    %c0_i32 = arith.constant 0 : i32
    %c0_i32_0 = arith.constant 0 : i32
    return %arg1, %c0_i32 : i32, i32
  }
  func.func @transform_2(%arg0: i32, %arg1: i32) -> (i32, i32) {
    %c0_i32 = arith.constant 0 : i32
    %c0_i32_0 = arith.constant 0 : i32
    %c0_i32_1 = arith.constant 0 : i32
    return %c0_i32, %c0_i32_0 : i32, i32
  }
  func.func @transform_3(%arg0: i32, %arg1: i32) -> (i32, i32) {
    %c0_i32 = arith.constant 0 : i32
    %c0_i32_0 = arith.constant 0 : i32
    return %arg0, %c0_i32 : i32, i32
  }
}

</mosaic_0001>

<llo_original>
// kernel: flatten_head_apply.1
$region0: #{flatten_head_apply.1}
  #allocation0 [shape = 'u32[]', space=smem, size = 0x4, offset = 0x4, fixed_abs, tag = 'smem constant byte address 0x4 - core index']
  #allocation1 [shape = 'u32[144,128]{1,0:T(1,128)}', space=vmem, size = 0x12000, scoped, tag = 'internal scratch']
  #allocation2 [shape = 'f32[16,128]{1,0:T(8,128)}', space=vmem, size = 0x2000, scoped, tag = 'scratch operand']
  %s0 = inlined_call_operand.vmem [shape: f32[8,128], index: 0, kind: input, shape index: {}]
  %s1 = inlined_call_operand.vmem [shape: bf16[128,128], index: 1, kind: input, shape index: {}]
  %s2 = inlined_call_operand.vmem [shape: f32[1,128], index: 2, kind: input, shape index: {}]
  %s3 = inlined_call_operand.hbm [shape: f32[8,128], index: 3, kind: output, shape index: {}]
  %s4 = sld [smem:[#allocation0]]
  $region30: #{flatten_head_apply.1} parent=0
    _
  %s6 = ssub.s32 1, %s4
  %s7 = scalar_select 0, %s6, %s4
  $region1: #{flatten_head_apply.1} parent=0
    #allocation3 [shape = 'u8[8192]{0}', space=vmem, size = 0x2000, scoped, tag = 'output window, operand 0, single buffered']
    #allocation4 [shape = 's32[1]{0}', space=sflag, size = 0x4, scoped, tag = 'scoped memory for flatten_head_apply.1']
    %8 = vsyncpa [#allocation4], 0
    // Predicated region
    $region2: #{flatten_head_apply.1} parent=1 // pred_check
      _
    $region3: #{flatten_head_apply.1} parent=1 // pred_check_branch
      %10 = sbr.rel (0) target = $region5
    $region4: #{flatten_head_apply.1} parent=1 // pred_region
      _
    $region5: #{flatten_head_apply.1} parent=1 // pred_fallthru
      _
    // Predicated region
    $region6: #{flatten_head_apply.1} parent=1 // pred_check
      _
    $region7: #{flatten_head_apply.1} parent=1 // pred_check_branch
      %12 = sbr.rel (0) target = $region9
    $region8: #{flatten_head_apply.1} parent=1 // pred_region
      _
    $region9: #{flatten_head_apply.1} parent=1 // pred_fallthru
      _
    // Predicated region
    $region10: #{flatten_head_apply.1} parent=1 // pred_check
      _
    $region11: #{flatten_head_apply.1} parent=1 // pred_check_branch
      %14 = sbr.rel (0) target = $region13
    $region12: #{flatten_head_apply.1} parent=1 // pred_region
      _
    $region13: #{flatten_head_apply.1} parent=1 // pred_fallthru
      _
    %p16 = scmp.eq.s32.totalorder 0, 0
    // Predicated region
    $region14: #{flatten_head_apply.1} parent=1 // pred_check
      %p17 = pneg %p16
    $region15: #{flatten_head_apply.1} parent=1 // pred_check_branch
      %19 = sbr.rel (%p17) target = $region17
    $region16: #{flatten_head_apply.1} parent=1 // pred_region
      %20 = vst [vmem:[#allocation2] sm:$0xff] 0.0
      %21 = vst [vmem:[#allocation2 + $0x8] sm:$0xff] 0.0
    $region17: #{flatten_head_apply.1} parent=1 // pred_fallthru
      _
    %v22 = vld [vmem:[%s0] sm:$0xff]
    %v23 = vld [vmem:[%s0 + $0x8] sm:$0xff]
    %v24 = vpack.c.bf16 %v23, %v22
    %v25 = vld [vmem:[#allocation2] sm:$0xff]
    %v26 = vld [vmem:[#allocation2 + $0x8] sm:$0xff]
    %v27 = vld [vmem:[%s1] sm:$0xf]
    %v28 = vld [vmem:[%s1 + $0x4] sm:$0xf]
    %v29 = vld [vmem:[%s1 + $0x8] sm:$0xf]
    %v30 = vld [vmem:[%s1 + $0xc] sm:$0xf]
    %v31 = vld [vmem:[%s1 + $0x10] sm:$0xf]
    %v32 = vld [vmem:[%s1 + $0x14] sm:$0xf]
    %v33 = vld [vmem:[%s1 + $0x18] sm:$0xf]
    %v34 = vld [vmem:[%s1 + $0x1c] sm:$0xf]
    %v35 = vld [vmem:[%s1 + $0x20] sm:$0xf]
    %v36 = vld [vmem:[%s1 + $0x24] sm:$0xf]
    %v37 = vld [vmem:[%s1 + $0x28] sm:$0xf]
    %v38 = vld [vmem:[%s1 + $0x2c] sm:$0xf]
    %v39 = vld [vmem:[%s1 + $0x30] sm:$0xf]
    %v40 = vld [vmem:[%s1 + $0x34] sm:$0xf]
    %v41 = vld [vmem:[%s1 + $0x38] sm:$0xf]
    %v42 = vld [vmem:[%s1 + $0x3c] sm:$0xf]
    %v59 = vunpack.c.l.b16 %v27
    %v60 = vunpack.c.l.b16 %v28
    %v61 = vunpack.c.l.b16 %v29
    %v62 = vunpack.c.l.b16 %v30
    %v63 = vunpack.c.l.b16 %v31
    %v64 = vunpack.c.l.b16 %v32
    %v65 = vunpack.c.l.b16 %v33
    %v66 = vunpack.c.l.b16 %v34
    %v67 = vunpack.c.l.b16 %v35
    %v68 = vunpack.c.l.b16 %v36
    %v69 = vunpack.c.l.b16 %v37
    %v70 = vunpack.c.l.b16 %v38
    %v71 = vunpack.c.l.b16 %v39
    %v72 = vunpack.c.l.b16 %v40
    %v73 = vunpack.c.l.b16 %v41
    %v74 = vunpack.c.l.b16 %v42
    %v75 = vpack.c.b16 %v60, %v59
    %v76 = vpack.c.b16 %v62, %v61
    %v77 = vpack.c.b16 %v64, %v63
    %v78 = vpack.c.b16 %v66, %v65
    %v79 = vpack.c.b16 %v68, %v67
    %v80 = vpack.c.b16 %v70, %v69
    %v81 = vpack.c.b16 %v72, %v71
    %v82 = vpack.c.b16 %v74, %v73
    %91 = vmatprep.subr.bf16.mxu0 0
    %92 = vmatpush1.bf16.msra.mxu0 %v75
    %93 = vmatprep.subr.bf16.mxu0 0
    %94 = vmatpush1.bf16.msra.mxu0 %v76
    %95 = vmatprep.subr.bf16.mxu0 0
    %96 = vmatpush1.bf16.msra.mxu0 %v77
    %97 = vmatprep.subr.bf16.mxu0 0
    %98 = vmatpush1.bf16.msra.mxu0 %v78
    %99 = vmatprep.subr.bf16.mxu0 0
    %100 = vmatpush1.bf16.msra.mxu0 %v79
    %101 = vmatprep.subr.bf16.mxu0 0
    %102 = vmatpush1.bf16.msra.mxu0 %v80
    %103 = vmatprep.subr.bf16.mxu0 0
    %104 = vmatpush1.bf16.msra.mxu0 %v81
    %105 = vmatprep.subr.bf16.mxu0 0
    %106 = vmatpush1.bf16.msra.mxu0 %v82
    %107 = vmatprep.subr.bf16.mxu0 0
    %108 = vmatpush1.bf16.msra.mxu0 0
    %109 = vmatprep.subr.bf16.mxu0 0
    %110 = vmatpush1.bf16.msra.mxu0 0
    %111 = vmatprep.subr.bf16.mxu0 0
    %112 = vmatpush1.bf16.msra.mxu0 0
    %113 = vmatprep.subr.bf16.mxu0 0
    %114 = vmatpush1.bf16.msra.mxu0 0
    %115 = vmatprep.subr.bf16.mxu0 0
    %116 = vmatpush1.bf16.msra.mxu0 0
    %117 = vmatprep.subr.bf16.mxu0 0
    %118 = vmatpush1.bf16.msra.mxu0 0
    %119 = vmatprep.subr.bf16.mxu0 0
    %120 = vmatpush1.bf16.msra.mxu0 0
    %121 = vmatprep.subr.bf16.mxu0 0
    %122 = vmatpush1.bf16.msra.mxu0 0
    %123 = vmatprep.mubr.bf16.mxu0 0
    %124 = vmatmul.mubr.bf16.gmra.mrb[0].mxu0 %v24
    %v125 = vpop.f32.mrb[0].mxu0
    %v126 = vadd.f32 0.0, %v125
    %v127 = vpop.f32.mrb[0].mxu0
    %v128 = vpop.f32.mrb[0].mxu0
    %v129 = vadd.f32 0.0, %v128
    %v130 = vpop.f32.mrb[0].mxu0
    %131 = vdwg.mxu0
    %v132 = vadd.f32 %v25, %v126
    %v133 = vadd.f32 %v26, %v129
    %134 = vst [vmem:[#allocation2] sm:$0xff] %v132
    %135 = vst [vmem:[#allocation2 + $0x8] sm:$0xff] %v133
    // Predicated region
    $region18: #{flatten_head_apply.1} parent=1 // pred_check
      %p136 = pneg %p16
    $region19: #{flatten_head_apply.1} parent=1 // pred_check_branch
      %138 = sbr.rel (%p136) target = $region21
    $region20: #{flatten_head_apply.1} parent=1 // pred_region
      %v139 = vld [vmem:[#allocation2] sm:$0xff]
      %v140 = vld [vmem:[#allocation2 + $0x8] sm:$0xff]
      %v141 = vld [vmem:[%s2] sm:$0x1]
      %v143 = vlaneseq
      %v144 = vshrl.u32 %v143, 7
      %v145 = vsub.s32 0, %v144
      %v146 = vrot.slane %v141, %v145
      %v148 = vadd.f32 %v139, %v146
      %v149 = vadd.f32 %v140, %v146
      %150 = vst [vmem:[#allocation3] sm:$0xff] %v148
      %151 = vst [vmem:[#allocation3 + $0x8] sm:$0xff] %v149
    $region21: #{flatten_head_apply.1} parent=1 // pred_fallthru
      _
    // Predicated region
    $region22: #{flatten_head_apply.1} parent=1 // pred_check
      _
    $region23: #{flatten_head_apply.1} parent=1 // pred_check_branch
      %153 = sbr.rel (0) target = $region25
    $region24: #{flatten_head_apply.1} parent=1 // pred_region
      %s155 = ssub.s32 256, 128
      %156 = vsyncadd [#allocation4], %s155
      %s157 = sshll.u32 [#allocation3], 4
      %s158 = int_to_ptr.vmem [resolvable:$true] %s157
      %163 = dma.vmem_to_hbm [thread:$0]  %s158, 128, %s3, [#allocation4], 128, 128, 8
    $region25: #{flatten_head_apply.1} parent=1 // pred_fallthru
      _
    // Predicated region
    $region26: #{flatten_head_apply.1} parent=1 // pred_check
      _
    $region27: #{flatten_head_apply.1} parent=1 // pred_check_branch
      %165 = sbr.rel (0) target = $region29
    $region28: #{flatten_head_apply.1} parent=1 // pred_region
      %166 = dma.done [#allocation4], 256
    $region29: #{flatten_head_apply.1} parent=1 // pred_fallthru
      _
    %167 = vsyncpa [#allocation4], 1

</llo_original>
